<compile_context>
chip_gen: v7x
topology: tpu7x:2x2x1
jax: 0.10.0
libtpu: 0.0.40
codegen_flags: <defaults>
</compile_context>

<pallas_src>
import jax
import jax.numpy as jnp
from jax.experimental import pallas as pl
from jax.experimental.pallas import tpu as pltpu


# --------------------------------------------------------------------------- #
# Kernel
# --------------------------------------------------------------------------- #
def _disc_kernel(wc_ref, b_ref, hpl_ref, hmi_ref, out_ref):
    # wc_ref  : (n_h, 1)  f32 column W @ c^T, resident in VMEM across grid steps
    # b_ref   : (1,)      f32 scalar Bilinear bias, in SMEM
    # hpl_ref : (TN, n_h) positive-embedding tile (input dtype, double-buffered)
    # hmi_ref : (TN, n_h) negative-embedding tile (input dtype, double-buffered)
    # out_ref : (TN, 2)   logits tile in caller layout: col 0 = sc_1, col 1 = sc_2
    wc = wc_ref[...]                                   # (n_h, 1) f32
    b = b_ref[0]                                       # scalar f32
    dims = (((1,), (0,)), ((), ()))                    # canonical (M,K) x (K,N)
    sc1 = jax.lax.dot_general(hpl_ref[...].astype(jnp.float32), wc, dims,
                              preferred_element_type=jnp.float32)      # (TN, 1)
    sc2 = jax.lax.dot_general(hmi_ref[...].astype(jnp.float32), wc, dims,
                              preferred_element_type=jnp.float32)      # (TN, 1)
    out_ref[:, 0:1] = (sc1 + b).astype(out_ref.dtype)
    out_ref[:, 1:2] = (sc2 + b).astype(out_ref.dtype)


# --------------------------------------------------------------------------- #
# Generation-aware sizing helpers
# --------------------------------------------------------------------------- #
def _tpu_info():
    try:
        return pltpu.get_tpu_info()
    except Exception:
        return None


def _vmem_capacity_bytes():
    info = _tpu_info()
    cap = getattr(info, "vmem_capacity_bytes", None) if info is not None else None
    if isinstance(cap, int) and cap > 0:
        return cap
    return 64 * 1024 * 1024        # conservative default: v7x per-TC VMEM


def _num_tensorcores():
    info = _tpu_info()
    if info is not None:
        for attr in ("num_cores", "num_tensorcores", "num_tensor_cores",
                     "tensorcore_count", "core_count"):
            v = getattr(info, attr, None)
            if isinstance(v, int) and 0 < v <= 8:
                return v
    # Unknown: assume a 2-TC chip (v7x).  The cost of one extra grid step on a
    # 1-TC chip is ~0.35 us; the win of splitting on v7x is up to 2x.
    return 2


def _choose_tile_rows(N, n_h, itemsize, budget_bytes, num_cores):
    """Pick an N-tile so 2 streams x 2 pipeline buffers (+ f32 upcast temps for
    sub-32-bit inputs) fit the per-generation VMEM budget, honestly accounting
    for lane padding of n_h to a multiple of 128."""
    n_h_pad = 128 * pl.cdiv(n_h, 128)
    upcast_temp = 4 if itemsize < 4 else 0            # in-kernel f32 copy of the tile
    per_row = 2 * (2 * itemsize + upcast_temp) * n_h_pad   # 2 streams
    max_rows = max(128, int(budget_bytes) // max(1, per_row))
    max_rows = max(128, (max_rows // 128) * 128)
    tn = max_rows
    # v7x megacore: guarantee >= 2 grid steps so the "parallel" axis splits.
    if num_cores >= 2 and N >= 256:
        tn = min(tn, max(128, ((N // 2) // 128) * 128))
    if tn >= N:
        return N                                       # single tile: block == array dims
    return max(128, (tn // 128) * 128)


# --------------------------------------------------------------------------- #
# Wrapper
# --------------------------------------------------------------------------- #
def discriminator_forward(c, h_pl, h_mi, w, b, s_bias1=None, s_bias2=None,
                          *, block_rows=None):
    """Pallas implementation of Discriminator.forward. Returns (N, 2) f32 logits.

    h_pl / h_mi keep their input dtype (bf16 recommended for large N — the kernel
    is a pure HBM stream); the contraction accumulates in float32."""
    N, n_h = h_pl.shape
    assert c.shape == (1, n_h) and h_mi.shape == (N, n_h) and w.shape == (n_h, n_h)

    emb_dtype = h_pl.dtype
    itemsize = jnp.dtype(emb_dtype).itemsize

    # Hoisted tiny matvec in float32: wc_col = W @ c^T.  Kept f32 (no rounding to
    # the embedding dtype) — the in-kernel upcast of bf16 tiles is hidden under DMA.
    wc_col = jnp.dot(w.astype(jnp.float32), c.astype(jnp.float32).T,
                     precision=jax.lax.Precision.HIGHEST)              # (n_h, 1)
    b_arr = jnp.reshape(jnp.asarray(b, jnp.float32), (1,))

    # Generation-aware VMEM budgets (v7x: 64 MiB/TC -> 48 MiB scoped; 128 MiB chips -> 96 MiB).
    vmem_limit = min(max(32 * 1024 * 1024, _vmem_capacity_bytes() * 3 // 4),
                     96 * 1024 * 1024)
    tile_budget = vmem_limit // 2
    num_cores = _num_tensorcores()

    tn = block_rows if block_rows is not None else _choose_tile_rows(
        N, n_h, itemsize, tile_budget, num_cores)
    if tn < N:
        assert tn % 8 == 0, "tiled block_rows must be a multiple of 8"
    grid = (pl.cdiv(N, tn),)

    cost = pl.CostEstimate(
        flops=4 * N * n_h,
        transcendentals=0,
        bytes_accessed=2 * N * n_h * itemsize + n_h * 4 + N * 2 * 4,
    )

    logits = pl.pallas_call(
        _disc_kernel,
        out_shape=jax.ShapeDtypeStruct((N, 2), jnp.float32),
        grid_spec=pltpu.PrefetchScalarGridSpec(
            num_scalar_prefetch=0,
            grid=grid,
            in_specs=[
                pl.BlockSpec((n_h, 1), lambda i: (0, 0)),                # wc (resident)
                pl.BlockSpec(memory_space=pltpu.MemorySpace.SMEM),       # scalar bias b
                pl.BlockSpec((tn, n_h), lambda i: (i, 0)),               # h_pl tile
                pl.BlockSpec((tn, n_h), lambda i: (i, 0)),               # h_mi tile
            ],
            out_specs=pl.BlockSpec((tn, 2), lambda i: (i, 0)),
        ),
        compiler_params=pltpu.CompilerParams(
            dimension_semantics=("parallel",),
            vmem_limit_bytes=int(vmem_limit),
        ),
        cost_estimate=cost,
    )(wc_col, b_arr, h_pl, h_mi)

    # Optional additive per-node biases (rarely used) are handled in a tiny
    # wrapper epilogue over the (N, 2) logits.
    if s_bias1 is not None:
        logits = logits.at[:, 0:1].add(jnp.reshape(s_bias1, (-1, 1)).astype(jnp.float32))
    if s_bias2 is not None:
        logits = logits.at[:, 1:2].add(jnp.reshape(s_bias2, (-1, 1)).astype(jnp.float32))
    return logits


def init_discriminator_params(key, n_h):
    """Mirror the PyTorch __init__: xavier_uniform_ on the (1, n_h, n_h) Bilinear weight, zero bias."""
    fan_in = n_h * n_h
    fan_out = n_h
    bound = (6.0 / (fan_in + fan_out)) ** 0.5
    w = jax.random.uniform(key, (n_h, n_h), jnp.float32, minval=-bound, maxval=bound)
    b = jnp.zeros((), jnp.float32)
    return w, b


def _reference(c, h_pl, h_mi, w, b, s_bias1=None, s_bias2=None):
    hi = jax.lax.Precision.HIGHEST
    wc = jnp.dot(w.astype(jnp.float32), c.astype(jnp.float32).T, precision=hi)   # (n_h, 1)
    sc1 = jnp.dot(h_pl.astype(jnp.float32), wc, precision=hi) + b
    sc2 = jnp.dot(h_mi.astype(jnp.float32), wc, precision=hi) + b
    if s_bias1 is not None:
        sc1 = sc1 + jnp.reshape(s_bias1, (-1, 1))
    if s_bias2 is not None:
        sc2 = sc2 + jnp.reshape(s_bias2, (-1, 1))
    return jnp.concatenate([sc1, sc2], axis=1)


if __name__ == "__main__":
    # --- Test 1: small f32 shapes, single-tile path, with s_bias1/s_bias2 ---
    n_h, N = 32, 8
    key = jax.random.PRNGKey(0)
    k_w, k_c, k_pl, k_mi, k_s1, k_s2 = jax.random.split(key, 6)

    w, b = init_discriminator_params(k_w, n_h)
    c = jax.random.normal(k_c, (1, n_h), jnp.float32)
    h_pl = jax.random.normal(k_pl, (N, n_h), jnp.float32)
    h_mi = jax.random.normal(k_mi, (N, n_h), jnp.float32)
    s1 = jax.random.normal(k_s1, (N, 1), jnp.float32)
    s2 = jax.random.normal(k_s2, (N, 1), jnp.float32)

    logits = jax.block_until_ready(
        discriminator_forward(c, h_pl, h_mi, w, b, s_bias1=s1, s_bias2=s2))
    ref = _reference(c, h_pl, h_mi, w, b, s_bias1=s1, s_bias2=s2)
    assert logits.shape == (N, 2)
    assert jnp.allclose(logits, ref, atol=1e-4, rtol=1e-4)

    # --- Test 2: f32 tiled / pipelined path (multiple N-tiles, ragged last tile) ---
    n_h2, N2 = 128, 300
    k2 = jax.random.PRNGKey(1)
    k_w2, k_c2, k_p2, k_m2 = jax.random.split(k2, 4)
    w2, b2 = init_discriminator_params(k_w2, n_h2)
    b2 = b2 + 0.5
    c2 = jax.random.normal(k_c2, (1, n_h2), jnp.float32)
    hp2 = jax.random.normal(k_p2, (N2, n_h2), jnp.float32)
    hm2 = jax.random.normal(k_m2, (N2, n_h2), jnp.float32)

    out2 = jax.block_until_ready(
        discriminator_forward(c2, hp2, hm2, w2, b2, block_rows=128))
    ref2 = _reference(c2, hp2, hm2, w2, b2)
    assert out2.shape == (N2, 2)
    assert jnp.allclose(out2, ref2, atol=1e-3, rtol=1e-3)

    # --- Test 3: bf16 embeddings, ragged tiled path + auto tile chooser ---
    n_h3, N3 = 256, 400
    k3 = jax.random.PRNGKey(2)
    k_w3, k_c3, k_p3, k_m3 = jax.random.split(k3, 4)
    w3, b3 = init_discriminator_params(k_w3, n_h3)
    b3 = b3 - 0.25
    c3 = jax.random.normal(k_c3, (1, n_h3), jnp.float32)
    hp3 = jax.random.normal(k_p3, (N3, n_h3), jnp.float32).astype(jnp.bfloat16)
    hm3 = jax.random.normal(k_m3, (N3, n_h3), jnp.float32).astype(jnp.bfloat16)
    ref3 = _reference(c3, hp3, hm3, w3, b3)

    out3 = jax.block_until_ready(
        discriminator_forward(c3, hp3, hm3, w3, b3, block_rows=128))   # ragged last tile (16 rows)
    assert out3.shape == (N3, 2)
    assert jnp.allclose(out3, ref3, atol=2e-2, rtol=2e-2)

    out3_auto = jax.block_until_ready(
        discriminator_forward(c3, hp3, hm3, w3, b3))                   # auto tile / megacore path
    assert jnp.allclose(out3_auto, ref3, atol=2e-2, rtol=2e-2)

    print("KERNEL_OK")
</pallas_src>

<mosaic_0001>
module attributes {stable_mosaic.version = 11 : i64} {
  func.func @_disc_kernel(%arg0: i32, %arg1: memref<32x1xf32, #tpu.memory_space<vmem>>, %arg2: memref<1xf32, #tpu.memory_space<smem>>, %arg3: memref<8x32xf32, #tpu.memory_space<vmem>>, %arg4: memref<8x32xf32, #tpu.memory_space<vmem>>, %arg5: memref<8x2xf32, #tpu.memory_space<vmem>>) attributes {dimension_semantics = [#tpu.dimension_semantics<parallel>], iteration_bounds = array<i64: 1>, scalar_prefetch = 0 : i64, scratch_operands = 0 : i64, tpu.core_type = #tpu.core_type<tc>, window_params = [{pipeline_mode = #tpu.pipeline_mode<synchronous>, transform_indices = @transform_0, window_bounds = array<i64: 32, 1>}, {transform_indices = @transform_1, window_bounds = array<i64: 1>}, {transform_indices = @transform_2, window_bounds = array<i64: 8, 32>}, {transform_indices = @transform_3, window_bounds = array<i64: 8, 32>}, {transform_indices = @transform_4, window_bounds = array<i64: 8, 2>}]} {
    %c0 = arith.constant 0 : index
    %c0_0 = arith.constant 0 : index
    %0 = vector.load %arg1[%c0, %c0_0] : memref<32x1xf32, #tpu.memory_space<vmem>>, vector<32x1xf32>
    %c0_1 = arith.constant 0 : index
    %1 = memref.load %arg2[%c0_1] : memref<1xf32, #tpu.memory_space<smem>>
    %c0_2 = arith.constant 0 : index
    %c0_3 = arith.constant 0 : index
    %2 = vector.load %arg3[%c0_2, %c0_3] : memref<8x32xf32, #tpu.memory_space<vmem>>, vector<8x32xf32>
    %cst = arith.constant dense<0.000000e+00> : vector<8x1xf32>
    %3 = tpu.matmul %2, %0, %cst {dimension_numbers = #tpu.dot_dimension_numbers<[1], [0], [0], [1], [0, 0, 1, 1], [], []>} : vector<8x32xf32>, vector<32x1xf32>, vector<8x1xf32> -> vector<8x1xf32>
    %c0_4 = arith.constant 0 : index
    %c0_5 = arith.constant 0 : index
    %4 = vector.load %arg4[%c0_4, %c0_5] : memref<8x32xf32, #tpu.memory_space<vmem>>, vector<8x32xf32>
    %cst_6 = arith.constant dense<0.000000e+00> : vector<8x1xf32>
    %5 = tpu.matmul %4, %0, %cst_6 {dimension_numbers = #tpu.dot_dimension_numbers<[1], [0], [0], [1], [0, 0, 1, 1], [], []>} : vector<8x32xf32>, vector<32x1xf32>, vector<8x1xf32> -> vector<8x1xf32>
    %6 = vector.broadcast %1 : f32 to vector<8x1xf32>
    %7 = arith.addf %3, %6 : vector<8x1xf32>
    %c0_7 = arith.constant 0 : index
    %c0_8 = arith.constant 0 : index
    %8 = vector.load %arg5[%c0_7, %c0_8] : memref<8x2xf32, #tpu.memory_space<vmem>>, vector<8x1xf32>
    tpu.vector_store %arg5[%c0_7, %c0_8], %7 {strides = array<i32>} : memref<8x2xf32, #tpu.memory_space<vmem>>, vector<8x1xf32>,
    %9 = vector.broadcast %1 : f32 to vector<8x1xf32>
    %10 = arith.addf %5, %9 : vector<8x1xf32>
    %c0_9 = arith.constant 0 : index
    %c1 = arith.constant 1 : index
    %11 = vector.load %arg5[%c0_9, %c1] : memref<8x2xf32, #tpu.memory_space<vmem>>, vector<8x1xf32>
    tpu.vector_store %arg5[%c0_9, %c1], %10 {strides = array<i32>} : memref<8x2xf32, #tpu.memory_space<vmem>>, vector<8x1xf32>,
    return
  }
  func.func @transform_0(%arg0: i32) -> (i32, i32) {
    %c0_i32 = arith.constant 0 : i32
    %c0_i32_0 = arith.constant 0 : i32
    %c0_i32_1 = arith.constant 0 : i32
    return %c0_i32, %c0_i32_0 : i32, i32
  }
  func.func @transform_1(%arg0: i32) -> i32 {
    %c0_i32 = arith.constant 0 : i32
    %c0_i32_0 = arith.constant 0 : i32
    return %c0_i32 : i32
  }
  func.func @transform_2(%arg0: i32) -> (i32, i32) {
    %c0_i32 = arith.constant 0 : i32
    %c0_i32_0 = arith.constant 0 : i32
    return %arg0, %c0_i32 : i32, i32
  }
  func.func @transform_3(%arg0: i32) -> (i32, i32) {
    %c0_i32 = arith.constant 0 : i32
    %c0_i32_0 = arith.constant 0 : i32
    return %arg0, %c0_i32 : i32, i32
  }
  func.func @transform_4(%arg0: i32) -> (i32, i32) {
    %c0_i32 = arith.constant 0 : i32
    %c0_i32_0 = arith.constant 0 : i32
    return %arg0, %c0_i32 : i32, i32
  }
}

</mosaic_0001>

<llo_original>
// kernel: tpu_custom_call.1
$region0: #{tpu_custom_call.1}
  #allocation0 [shape = 'u32[]', space=smem, size = 0x4, offset = 0x4, fixed_abs, tag = 'smem constant byte address 0x4 - core index']
  #allocation1 [shape = 'u32[144,128]{1,0:T(1,128)}', space=vmem, size = 0x12000, scoped, tag = 'internal scratch']
  #allocation2 [shape = 'f32[1]{0:T(128)S(6)}', space=smem, size = 0x200, scoped, tag = 'scoped memory for tpu_custom_call.1']
  %s0 = inlined_call_operand.vmem [shape: f32[32,1], index: 0, kind: input, shape index: {}]
  %s1 = inlined_call_operand.<no memory space> [shape: f32[1], index: 1, kind: input, shape index: {}]
  %s2 = inlined_call_operand.vmem [shape: f32[8,32], index: 2, kind: input, shape index: {}]
  %s3 = inlined_call_operand.vmem [shape: f32[8,32], index: 3, kind: input, shape index: {}]
  %s4 = inlined_call_operand.vmem [shape: f32[8,2], index: 4, kind: output, shape index: {}]
  %s5 = sld [smem:[#allocation0]]
  $region26: #{tpu_custom_call.1} parent=0
    _
  %s7 = ssub.s32 1, %s5
  %s8 = scalar_select 0, %s7, %s5
  %9 = sst [smem:[#allocation2]] %s1
  // Predicated region
  $region2: #{tpu_custom_call.1} parent=0 // pred_check
    _
  $region3: #{tpu_custom_call.1} parent=0 // pred_check_branch
    %11 = sbr.rel (0) target = $region5
  $region4: #{tpu_custom_call.1} parent=0 // pred_region
    _
  $region5: #{tpu_custom_call.1} parent=0 // pred_fallthru
    _
  // Predicated region
  $region6: #{tpu_custom_call.1} parent=0 // pred_check
    _
  $region7: #{tpu_custom_call.1} parent=0 // pred_check_branch
    %13 = sbr.rel (0) target = $region9
  $region8: #{tpu_custom_call.1} parent=0 // pred_region
    _
  $region9: #{tpu_custom_call.1} parent=0 // pred_fallthru
    _
  // Predicated region
  $region10: #{tpu_custom_call.1} parent=0 // pred_check
    _
  $region11: #{tpu_custom_call.1} parent=0 // pred_check_branch
    %15 = sbr.rel (0) target = $region13
  $region12: #{tpu_custom_call.1} parent=0 // pred_region
    _
  $region13: #{tpu_custom_call.1} parent=0 // pred_fallthru
    _
  // Predicated region
  $region14: #{tpu_custom_call.1} parent=0 // pred_check
    _
  $region15: #{tpu_custom_call.1} parent=0 // pred_check_branch
    %17 = sbr.rel (0) target = $region17
  $region16: #{tpu_custom_call.1} parent=0 // pred_region
    _
  $region17: #{tpu_custom_call.1} parent=0 // pred_fallthru
    _
  %v18 = vld [vmem:[%s0] sm:$0xff]
  %v19 = vld [vmem:[%s0 + $0x8] sm:$0xff]
  %v20 = vld [vmem:[%s0 + $0x10] sm:$0xff]
  %v21 = vld [vmem:[%s0 + $0x18] sm:$0xff]
  %s22 = sld [smem:[#allocation2]]
  %v23 = vld [vmem:[%s2] sm:$0xff]
  %v24 = vld [vmem:[%s3] sm:$0xff]
  %v25 = vstv %s22
  %vm26 = vcmask 261120
  %v28 = vsel %vm26, %v23, 0
  %30 = vmatprep.subr.mxu0 0.0
  %31 = vmatpush1.msra.mxu0 %v18
  %32 = vmatprep.subr.mxu0 0.0
  %33 = vmatpush1.msra.mxu0 %v19
  %34 = vmatprep.subr.mxu0 0.0
  %35 = vmatpush1.msra.mxu0 %v20
  %36 = vmatprep.subr.mxu0 0.0
  %37 = vmatpush1.msra.mxu0 %v21
  %38 = vmatprep.subr.mxu0 0.0
  %39 = vmatpush1.msra.mxu0 0.0
  %40 = vmatprep.subr.mxu0 0.0
  %41 = vmatpush1.msra.mxu0 0.0
  %42 = vmatprep.subr.mxu0 0.0
  %43 = vmatpush1.msra.mxu0 0.0
  %44 = vmatprep.subr.mxu0 0.0
  %45 = vmatpush1.msra.mxu0 0.0
  %46 = vmatprep.subr.mxu0 0.0
  %47 = vmatpush1.msra.mxu0 0.0
  %48 = vmatprep.subr.mxu0 0.0
  %49 = vmatpush1.msra.mxu0 0.0
  %50 = vmatprep.subr.mxu0 0.0
  %51 = vmatpush1.msra.mxu0 0.0
  %52 = vmatprep.subr.mxu0 0.0
  %53 = vmatpush1.msra.mxu0 0.0
  %54 = vmatprep.subr.mxu0 0.0
  %55 = vmatpush1.msra.mxu0 0.0
  %56 = vmatprep.subr.mxu0 0.0
  %57 = vmatpush1.msra.mxu0 0.0
  %58 = vmatprep.subr.mxu0 0.0
  %59 = vmatpush1.msra.mxu0 0.0
  %60 = vmatprep.subr.mxu0 0.0
  %61 = vmatpush1.msra.mxu0 0.0
  %62 = vmatprep.subr.mxu0 0.0
  %63 = vmatpush1.msra.mxu0 0.0
  %64 = vmatprep.subr.mxu0 0.0
  %65 = vmatpush1.msra.mxu0 0.0
  %66 = vmatprep.subr.mxu0 0.0
  %67 = vmatpush1.msra.mxu0 0.0
  %68 = vmatprep.subr.mxu0 0.0
  %69 = vmatpush1.msra.mxu0 0.0
  %70 = vmatprep.subr.mxu0 0.0
  %71 = vmatpush1.msra.mxu0 0.0
  %72 = vmatprep.subr.mxu0 0.0
  %73 = vmatpush1.msra.mxu0 0.0
  %74 = vmatprep.subr.mxu0 0.0
  %75 = vmatpush1.msra.mxu0 0.0
  %76 = vmatprep.subr.mxu0 0.0
  %77 = vmatpush1.msra.mxu0 0.0
  %78 = vmatprep.subr.mxu0 0.0
  %79 = vmatpush1.msra.mxu0 0.0
  %80 = vmatprep.subr.mxu0 0.0
  %81 = vmatpush1.msra.mxu0 0.0
  %82 = vmatprep.subr.mxu0 0.0
  %83 = vmatpush1.msra.mxu0 0.0
  %84 = vmatprep.subr.mxu0 0.0
  %85 = vmatpush1.msra.mxu0 0.0
  %86 = vmatprep.subr.mxu0 0.0
  %87 = vmatpush1.msra.mxu0 0.0
  %88 = vmatprep.subr.mxu0 0.0
  %89 = vmatpush1.msra.mxu0 0.0
  %90 = vmatprep.subr.mxu0 0.0
  %91 = vmatpush1.msra.mxu0 0.0
  %92 = vmatprep.subr.mxu0 0.0
  %93 = vmatpush1.msra.mxu0 0.0
  %94 = vmatprep.mubr.f32.mxu0 0.0
  %95 = vmatmul.mubr.f32.gmra.mrb[0].mxu0 %v28
  %v96 = vpop.f32.mrb[0].mxu0
  %v97 = vadd.f32 %v25, %v96
  %v98 = vpop.f32.mrb[0].mxu0
  %99 = vdwg.mxu0
  %vm100 = vcmask 7168
  %101 = vst.msk [vmem:[%s4] sm:$0xff] %vm100, %v97
  %v103 = vsel %vm26, %v24, 0
  %105 = vmatprep.subr.mxu0 0.0
  %106 = vmatpush1.msra.mxu0 %v18
  %107 = vmatprep.subr.mxu0 0.0
  %108 = vmatpush1.msra.mxu0 %v19
  %109 = vmatprep.subr.mxu0 0.0
  %110 = vmatpush1.msra.mxu0 %v20
  %111 = vmatprep.subr.mxu0 0.0
  %112 = vmatpush1.msra.mxu0 %v21
  %113 = vmatprep.subr.mxu0 0.0
  %114 = vmatpush1.msra.mxu0 0.0
  %115 = vmatprep.subr.mxu0 0.0
  %116 = vmatpush1.msra.mxu0 0.0
  %117 = vmatprep.subr.mxu0 0.0
  %118 = vmatpush1.msra.mxu0 0.0
  %119 = vmatprep.subr.mxu0 0.0
  %120 = vmatpush1.msra.mxu0 0.0
  %121 = vmatprep.subr.mxu0 0.0
  %122 = vmatpush1.msra.mxu0 0.0
  %123 = vmatprep.subr.mxu0 0.0
  %124 = vmatpush1.msra.mxu0 0.0
  %125 = vmatprep.subr.mxu0 0.0
  %126 = vmatpush1.msra.mxu0 0.0
  %127 = vmatprep.subr.mxu0 0.0
  %128 = vmatpush1.msra.mxu0 0.0
  %129 = vmatprep.subr.mxu0 0.0
  %130 = vmatpush1.msra.mxu0 0.0
  %131 = vmatprep.subr.mxu0 0.0
  %132 = vmatpush1.msra.mxu0 0.0
  %133 = vmatprep.subr.mxu0 0.0
  %134 = vmatpush1.msra.mxu0 0.0
  %135 = vmatprep.subr.mxu0 0.0
  %136 = vmatpush1.msra.mxu0 0.0
  %137 = vmatprep.subr.mxu0 0.0
  %138 = vmatpush1.msra.mxu0 0.0
  %139 = vmatprep.subr.mxu0 0.0
  %140 = vmatpush1.msra.mxu0 0.0
  %141 = vmatprep.subr.mxu0 0.0
  %142 = vmatpush1.msra.mxu0 0.0
  %143 = vmatprep.subr.mxu0 0.0
  %144 = vmatpush1.msra.mxu0 0.0
  %145 = vmatprep.subr.mxu0 0.0
  %146 = vmatpush1.msra.mxu0 0.0
  %147 = vmatprep.subr.mxu0 0.0
  %148 = vmatpush1.msra.mxu0 0.0
  %149 = vmatprep.subr.mxu0 0.0
  %150 = vmatpush1.msra.mxu0 0.0
  %151 = vmatprep.subr.mxu0 0.0
  %152 = vmatpush1.msra.mxu0 0.0
  %153 = vmatprep.subr.mxu0 0.0
  %154 = vmatpush1.msra.mxu0 0.0
  %155 = vmatprep.subr.mxu0 0.0
  %156 = vmatpush1.msra.mxu0 0.0
  %157 = vmatprep.subr.mxu0 0.0
  %158 = vmatpush1.msra.mxu0 0.0
  %159 = vmatprep.subr.mxu0 0.0
  %160 = vmatpush1.msra.mxu0 0.0
  %161 = vmatprep.subr.mxu0 0.0
  %162 = vmatpush1.msra.mxu0 0.0
  %163 = vmatprep.subr.mxu0 0.0
  %164 = vmatpush1.msra.mxu0 0.0
  %165 = vmatprep.subr.mxu0 0.0
  %166 = vmatpush1.msra.mxu0 0.0
  %167 = vmatprep.subr.mxu0 0.0
  %168 = vmatpush1.msra.mxu0 0.0
  %169 = vmatprep.mubr.f32.mxu0 0.0
  %170 = vmatmul.mubr.f32.gmra.mrb[0].mxu0 %v103
  %v171 = vpop.f32.mrb[0].mxu0
  %v172 = vadd.f32 %v25, %v171
  %v173 = vpop.f32.mrb[0].mxu0
  %174 = vdwg.mxu0
  %176 = vrot.lane.b32.xlu0 %v172, 1
  %v177 = vpop.permute.xlu0 %176
  %vm179 = vcmask 15368
  %180 = vst.msk [vmem:[%s4] sm:$0xff] %vm179, %v177
  // Predicated region
  $region18: #{tpu_custom_call.1} parent=0 // pred_check
    _
  $region19: #{tpu_custom_call.1} parent=0 // pred_check_branch
    %182 = sbr.rel (0) target = $region21
  $region20: #{tpu_custom_call.1} parent=0 // pred_region
    _
  $region21: #{tpu_custom_call.1} parent=0 // pred_fallthru
    _
  // Predicated region
  $region22: #{tpu_custom_call.1} parent=0 // pred_check
    _
  $region23: #{tpu_custom_call.1} parent=0 // pred_check_branch
    %184 = sbr.rel (0) target = $region25
  $region24: #{tpu_custom_call.1} parent=0 // pred_region
    _
  $region25: #{tpu_custom_call.1} parent=0 // pred_fallthru
    _

</llo_original>
